<compile_context>
chip_gen: v5e
topology: v5e:2x2
jax: 0.10.0
libtpu: 0.0.40
codegen_flags: <defaults>
</compile_context>

<pallas_src>
import functools

import jax
import jax.numpy as jnp
from jax import lax
from jax.experimental import pallas as pl
from jax.experimental.pallas import tpu as pltpu


def _round_up(a, b):
    return (a + b - 1) // b * b


def _temporal_block_kernel(xa_ref, xb_ref, w1_ref, b1_ref, w2_ref, b2_ref, alpha_ref,
                           *rest, K, dilation, padding, shift, L_true, TL, has_downsample):
    if has_downsample:
        wd_ref, bd_ref, o_ref = rest
    else:
        (o_ref,) = rest

    # 2*TL-wide input window, cast to bf16 once at (C, TL) granularity.
    xa = xa_ref[0]                                    # (C_in_p, TL) f32
    xb = xb_ref[0]                                    # (C_in_p, TL) f32
    x_bf = jnp.concatenate([xa.astype(jnp.bfloat16), xb.astype(jnp.bfloat16)], axis=1)

    L1t = TL + padding                                # y1 stripe length (with halo)

    def taps(v, n_out):
        # v: (C, W) bf16.  Returns (K*C, n_out): tap k = v[:, k*dilation : k*dilation+n_out].
        return jnp.concatenate(
            [v[:, k * dilation:k * dilation + n_out] for k in range(K)], axis=0)

    # conv1 (dilated) + chomp + PReLU : one (C_out, K*C_in) @ (K*C_in, L1t) MXU matmul.
    y1 = jnp.dot(w1_ref[...], taps(x_bf, L1t),
                 preferred_element_type=jnp.float32) + b1_ref[...]
    y1 = jnp.where(y1 > 0, y1, alpha_ref[0] * y1)

    # Zero y1 positions that fall outside the true sequence [0, L): the reference
    # zero-pads y1 before conv2, it does not extrapolate the conv through the padding.
    j = pl.program_id(1)
    s = j * TL - shift + lax.broadcasted_iota(jnp.int32, (1, L1t), 1)
    y1 = jnp.where((s >= 0) & (s < L_true), y1, 0.0)

    # conv2 (dilated) + chomp + PReLU.
    y2 = jnp.dot(w2_ref[...], taps(y1.astype(jnp.bfloat16), TL),
                 preferred_element_type=jnp.float32) + b2_ref[...]
    y2 = jnp.where(y2 > 0, y2, alpha_ref[1] * y2)

    # Residual stripe: x at window columns [2*shift, 2*shift + TL).
    lo = 2 * shift
    if lo == 0:
        x_res = xa
    elif lo == TL:
        x_res = xb
    else:
        x_res = jnp.concatenate([xa[:, lo:], xb[:, :lo]], axis=1)

    if has_downsample:
        res = jnp.dot(wd_ref[...], x_res.astype(jnp.bfloat16),
                      preferred_element_type=jnp.float32) + bd_ref[...]
    else:
        res = x_res                                   # identity residual, exact f32

    z = y2 + res
    o_ref[0] = jnp.where(z > 0, z, alpha_ref[2] * z).astype(o_ref.dtype)


def temporal_block_forward(x, params, *, kernel_size, stride, dilation, padding,
                           causal, time_tile=1024):
    """x: (N, C_in, L) float32 (PyTorch NCL). Returns (N, C_out, L) float32 (NCL)."""
    # TODO(synk): general stride > 1 not implemented (the TCN block uses stride=1).
    assert stride == 1
    N, C_in, L = x.shape
    w1 = params["w1"]                                 # (C_out, C_in, K) effective weights
    C_out, _, K = w1.shape
    assert K == kernel_size
    if causal:
        off = 0
    else:
        assert padding % 2 == 0, "non-causal Chomp1d split assumes even padding"
        off = padding // 2
    shift = padding - off                             # left context depth of each conv
    chomp = padding if causal else 2 * off
    L1 = L + 2 * padding - dilation * (K - 1) - chomp
    L2 = L1 + 2 * padding - dilation * (K - 1) - chomp
    assert L2 == L, "residual add requires matching lengths (TCN padding convention)"

    has_downsample = C_in != C_out

    # ---- padded sizes: channels -> sublane multiples, time -> 128-lane multiples ----
    C_in_p, C_out_p = _round_up(C_in, 8), _round_up(C_out, 8)
    # TODO(synk): generation-parameterize the tile (v5e/v6e 128 MiB VMEM can take
    # TL=2048+; v7x has 64 MiB).  1024 is a safe near-roofline default everywhere.
    TL = max(max(128, _round_up(2 * padding, 128)),
             min(_round_up(max(time_tile, 1), 128), _round_up(L, 128)))
    assert 2 * padding <= TL                          # halo fits in the 2-block window
    L_pad = _round_up(L, TL)
    nT = L_pad // TL

    # x zero-extended: 2*shift left halo + right zeros (conv zero padding, stripe
    # alignment, and one extra block so index_map j+1 is always in range).
    x_pad = jnp.pad(x.astype(jnp.float32),
                    ((0, 0), (0, C_in_p - C_in),
                     (2 * shift, (nT + 1) * TL - 2 * shift - L)))

    def pad_w(w, co, ci):
        return jnp.pad(w, ((0, co - w.shape[0]), (0, ci - w.shape[1]), (0, 0)))

    # Fused per-tap matmul weights (bf16 operands; f32 accumulation in-kernel).
    w1f = jnp.transpose(pad_w(w1, C_out_p, C_in_p), (0, 2, 1)
                        ).reshape(C_out_p, K * C_in_p).astype(jnp.bfloat16)
    w2f = jnp.transpose(pad_w(params["w2"], C_out_p, C_out_p), (0, 2, 1)
                        ).reshape(C_out_p, K * C_out_p).astype(jnp.bfloat16)
    b1c = jnp.pad(params["b1"].astype(jnp.float32), (0, C_out_p - C_out)).reshape(C_out_p, 1)
    b2c = jnp.pad(params["b2"].astype(jnp.float32), (0, C_out_p - C_out)).reshape(C_out_p, 1)
    alphas = jnp.stack([jnp.asarray(params["a1"], jnp.float32),
                        jnp.asarray(params["a2"], jnp.float32),
                        jnp.asarray(params["a3"], jnp.float32)])      # (3,) -> SMEM

    inputs = [x_pad, x_pad, w1f, b1c, w2f, b2c, alphas]
    # TODO(synk): weight/bias specs could be single-buffered (pipeline_mode=
    # pl.Buffered(1)) since their index_map is constant; left at default for safety.
    in_specs = [
        pl.BlockSpec((1, C_in_p, TL), lambda n, j: (n, 0, j)),        # current stripe
        pl.BlockSpec((1, C_in_p, TL), lambda n, j: (n, 0, j + 1)),    # halo stripe
        pl.BlockSpec((C_out_p, K * C_in_p), lambda n, j: (0, 0)),
        pl.BlockSpec((C_out_p, 1), lambda n, j: (0, 0)),
        pl.BlockSpec((C_out_p, K * C_out_p), lambda n, j: (0, 0)),
        pl.BlockSpec((C_out_p, 1), lambda n, j: (0, 0)),
        pl.BlockSpec(memory_space=pltpu.MemorySpace.SMEM),            # PReLU alphas
    ]
    if has_downsample:
        inputs += [jnp.pad(params["wd"][:, :, 0],
                           ((0, C_out_p - C_out), (0, C_in_p - C_in))).astype(jnp.bfloat16),
                   jnp.pad(params["bd"].astype(jnp.float32),
                           (0, C_out_p - C_out)).reshape(C_out_p, 1)]
        in_specs += [pl.BlockSpec((C_out_p, C_in_p), lambda n, j: (0, 0)),
                     pl.BlockSpec((C_out_p, 1), lambda n, j: (0, 0))]

    kernel = functools.partial(
        _temporal_block_kernel, K=K, dilation=dilation, padding=padding, shift=shift,
        L_true=L, TL=TL, has_downsample=has_downsample)

    flops = 2 * N * L * K * C_out * (C_in + C_out)
    if has_downsample:
        flops += 2 * N * L * C_out * C_in
    bytes_accessed = 4 * N * L * (C_in + C_out) + 2 * (int(w1f.size) + int(w2f.size))

    out = pl.pallas_call(
        kernel,
        out_shape=jax.ShapeDtypeStruct((N, C_out_p, L_pad), jnp.float32),
        grid=(N, nT),
        in_specs=in_specs,
        out_specs=pl.BlockSpec((1, C_out_p, TL), lambda n, j: (n, 0, j)),
        compiler_params=pltpu.CompilerParams(
            dimension_semantics=("parallel", "parallel")),
        cost_estimate=pl.CostEstimate(flops=int(flops), transcendentals=0,
                                      bytes_accessed=int(bytes_accessed)),
    )(*inputs)
    return out[:, :C_out, :L]


# ----------------------- pure-JAX reference (for verification) -----------------------
# Mirrors the kernel's numerics: bf16 conv operands, f32 accumulation / elementwise.
def _conv1d_ref(x, w, b, stride, padding, dilation):
    out = lax.conv_general_dilated(
        x.astype(jnp.bfloat16), w.astype(jnp.bfloat16),
        window_strides=(stride,), padding=[(padding, padding)],
        rhs_dilation=(dilation,), dimension_numbers=("NCH", "OIH", "NCH"),
        preferred_element_type=jnp.float32)
    return out + b[None, :, None]


def _chomp_ref(x, chomp_size, causal):
    return x[:, :, :-chomp_size] if causal else x[:, :, chomp_size:-chomp_size]


def _prelu_ref(x, a):
    return jnp.where(x > 0, x, a * x)


def reference_forward(x, p, *, kernel_size, stride, dilation, padding, causal):
    chomp = padding if causal else padding // 2
    out = _prelu_ref(_chomp_ref(_conv1d_ref(x, p["w1"], p["b1"], stride, padding, dilation),
                                chomp, causal), p["a1"])
    out = _prelu_ref(_chomp_ref(_conv1d_ref(out, p["w2"], p["b2"], stride, padding, dilation),
                                chomp, causal), p["a2"])
    if p["w1"].shape[0] != p["w1"].shape[1]:                 # C_out != C_in -> downsample
        res = _conv1d_ref(x, p["wd"], p["bd"], 1, 0, 1)
    else:
        res = x
    return _prelu_ref(out + res, p["a3"])


if __name__ == "__main__":
    def weight_norm(v, g):
        # PyTorch weight_norm (dim=0): w = g * v / ||v|| over dims (1, 2)
        norm = jnp.sqrt(jnp.sum(v * v, axis=(1, 2), keepdims=True))
        return g.reshape(-1, 1, 1) * v / norm

    def make_params(key, C_in, C_out, K, with_downsample):
        ks = jax.random.split(key, 8)
        p = dict(
            w1=weight_norm(0.02 * jax.random.normal(ks[0], (C_out, C_in, K), jnp.float32),
                           0.5 + jnp.abs(jax.random.normal(ks[1], (C_out,), jnp.float32))),
            b1=0.01 * jax.random.normal(ks[2], (C_out,), jnp.float32),
            w2=weight_norm(0.02 * jax.random.normal(ks[3], (C_out, C_out, K), jnp.float32),
                           0.5 + jnp.abs(jax.random.normal(ks[4], (C_out,), jnp.float32))),
            b2=0.01 * jax.random.normal(ks[5], (C_out,), jnp.float32),
            a1=jnp.float32(0.25), a2=jnp.float32(0.25), a3=jnp.float32(0.25),
        )
        if with_downsample:
            p["wd"] = 0.01 * jax.random.normal(ks[6], (C_out, C_in, 1), jnp.float32)
            p["bd"] = 0.01 * jax.random.normal(ks[7], (C_out,), jnp.float32)
        return p

    def run_case(key, *, N, C_in, C_out, L, K, dilation, causal, time_tile=1024):
        padding = (K - 1) * dilation              # standard TCN padding
        kp, kx = jax.random.split(key)
        params = make_params(kp, C_in, C_out, K, with_downsample=(C_in != C_out))
        x = jax.random.normal(kx, (N, C_in, L), jnp.float32)
        out = jax.block_until_ready(temporal_block_forward(
            x, params, kernel_size=K, stride=1, dilation=dilation,
            padding=padding, causal=causal, time_tile=time_tile))
        ref = reference_forward(x, params, kernel_size=K, stride=1,
                                dilation=dilation, padding=padding, causal=causal)
        assert out.shape == ref.shape == (N, C_out, L)
        err = float(jnp.max(jnp.abs(out - ref)))
        # tolerance loosened vs. 1e-4: accumulation order differs from XLA's conv
        assert jnp.allclose(out, ref, atol=1e-3, rtol=1e-3), err
        return err

    key = jax.random.PRNGKey(0)
    k1, k2, k3, k4 = jax.random.split(key, 4)
    # causal Chomp1d + 1x1 downsample residual (single stripe)
    run_case(k1, N=2, C_in=4, C_out=8, L=16, K=3, dilation=2, causal=True)
    # non-causal Chomp1d + identity residual (single stripe)
    run_case(k2, N=2, C_in=8, C_out=8, L=16, K=3, dilation=2, causal=False)
    # multi-stripe time tiling (halo + boundary masking), causal + identity residual
    run_case(k3, N=2, C_in=8, C_out=8, L=300, K=3, dilation=4, causal=True, time_tile=128)
    # multi-stripe, non-causal chomp + 1x1 downsample residual
    run_case(k4, N=1, C_in=4, C_out=8, L=260, K=3, dilation=2, causal=False, time_tile=128)
    print("KERNEL_OK")
</pallas_src>

<mosaic_0001>
module attributes {stable_mosaic.version = 11 : i64} {
  func.func @_temporal_block_kernel(%arg0: i32, %arg1: i32, %arg2: memref<1x8x128xf32, #tpu.memory_space<vmem>>, %arg3: memref<1x8x128xf32, #tpu.memory_space<vmem>>, %arg4: memref<8x24xbf16, #tpu.memory_space<vmem>>, %arg5: memref<8x1xf32, #tpu.memory_space<vmem>>, %arg6: memref<8x24xbf16, #tpu.memory_space<vmem>>, %arg7: memref<8x1xf32, #tpu.memory_space<vmem>>, %arg8: memref<3xf32, #tpu.memory_space<smem>>, %arg9: memref<8x8xbf16, #tpu.memory_space<vmem>>, %arg10: memref<8x1xf32, #tpu.memory_space<vmem>>, %arg11: memref<1x8x128xf32, #tpu.memory_space<vmem>>) attributes {dimension_semantics = [#tpu.dimension_semantics<parallel>, #tpu.dimension_semantics<parallel>], iteration_bounds = array<i64: 2, 1>, scalar_prefetch = 0 : i64, scratch_operands = 0 : i64, tpu.core_type = #tpu.core_type<tc>, window_params = [{transform_indices = @transform_0, window_bounds = array<i64: 1, 8, 128>}, {transform_indices = @transform_1, window_bounds = array<i64: 1, 8, 128>}, {pipeline_mode = #tpu.pipeline_mode<synchronous>, transform_indices = @transform_2, window_bounds = array<i64: 8, 24>}, {pipeline_mode = #tpu.pipeline_mode<synchronous>, transform_indices = @transform_3, window_bounds = array<i64: 8, 1>}, {pipeline_mode = #tpu.pipeline_mode<synchronous>, transform_indices = @transform_4, window_bounds = array<i64: 8, 24>}, {pipeline_mode = #tpu.pipeline_mode<synchronous>, transform_indices = @transform_5, window_bounds = array<i64: 8, 1>}, {transform_indices = @transform_6, window_bounds = array<i64: 3>}, {pipeline_mode = #tpu.pipeline_mode<synchronous>, transform_indices = @transform_7, window_bounds = array<i64: 8, 8>}, {pipeline_mode = #tpu.pipeline_mode<synchronous>, transform_indices = @transform_8, window_bounds = array<i64: 8, 1>}, {transform_indices = @transform_9, window_bounds = array<i64: 1, 8, 128>}]} {
    %c0 = arith.constant 0 : index
    %c0_0 = arith.constant 0 : index
    %c0_1 = arith.constant 0 : index
    %0 = vector.load %arg2[%c0, %c0_0, %c0_1] : memref<1x8x128xf32, #tpu.memory_space<vmem>>, vector<1x8x128xf32>
    %1 = vector.shape_cast %0 : vector<1x8x128xf32> to vector<8x128xf32>
    %c0_2 = arith.constant 0 : index
    %c0_3 = arith.constant 0 : index
    %c0_4 = arith.constant 0 : index
    %2 = vector.load %arg3[%c0_2, %c0_3, %c0_4] : memref<1x8x128xf32, #tpu.memory_space<vmem>>, vector<1x8x128xf32>
    %3 = vector.shape_cast %2 : vector<1x8x128xf32> to vector<8x128xf32>
    %4 = arith.truncf %1 : vector<8x128xf32> to vector<8x128xbf16>
    %5 = arith.truncf %3 : vector<8x128xf32> to vector<8x128xbf16>
    %6 = tpu.concatenate %4, %5 in 1 : vector<8x128xbf16>, vector<8x128xbf16> -> vector<8x256xbf16>
    %c0_5 = arith.constant 0 : index
    %c0_6 = arith.constant 0 : index
    %7 = vector.load %arg4[%c0_5, %c0_6] : memref<8x24xbf16, #tpu.memory_space<vmem>>, vector<8x24xbf16>
    %8 = vector.extract_strided_slice %6 {offsets = [0, 0], sizes = [8, 132], strides = [1, 1]} : vector<8x256xbf16> to vector<8x132xbf16>
    %9 = vector.extract_strided_slice %6 {offsets = [0, 2], sizes = [8, 132], strides = [1, 1]} : vector<8x256xbf16> to vector<8x132xbf16>
    %10 = vector.extract_strided_slice %6 {offsets = [0, 4], sizes = [8, 132], strides = [1, 1]} : vector<8x256xbf16> to vector<8x132xbf16>
    %11 = tpu.concatenate %8, %9, %10 in 0 : vector<8x132xbf16>, vector<8x132xbf16>, vector<8x132xbf16> -> vector<24x132xbf16>
    %cst = arith.constant dense<0.000000e+00> : vector<8x132xf32>
    %12 = tpu.matmul %7, %11, %cst {dimension_numbers = #tpu.dot_dimension_numbers<[1], [0], [0], [1], [0, 0, 1, 1], [], []>} : vector<8x24xbf16>, vector<24x132xbf16>, vector<8x132xf32> -> vector<8x132xf32>
    %c0_7 = arith.constant 0 : index
    %c0_8 = arith.constant 0 : index
    %13 = vector.load %arg5[%c0_7, %c0_8] : memref<8x1xf32, #tpu.memory_space<vmem>>, vector<8x1xf32>
    %14 = vector.broadcast %13 : vector<8x1xf32> to vector<8x132xf32>
    %15 = arith.addf %12, %14 : vector<8x132xf32>
    %cst_9 = arith.constant 0.000000e+00 : f32
    %16 = vector.broadcast %cst_9 : f32 to vector<8x132xf32>
    %17 = arith.cmpf ogt, %15, %16 : vector<8x132xf32>
    %c0_10 = arith.constant 0 : index
    %18 = memref.load %arg8[%c0_10] : memref<3xf32, #tpu.memory_space<smem>>
    %19 = vector.broadcast %18 : f32 to vector<8x132xf32>
    %20 = arith.mulf %19, %15 : vector<8x132xf32>
    %21 = arith.select %17, %15, %20 : vector<8x132xi1>, vector<8x132xf32>
    %c128_i32 = arith.constant 128 : i32
    %22 = arith.muli %arg1, %c128_i32 : i32
    %c4_i32 = arith.constant 4 : i32
    %23 = arith.subi %22, %c4_i32 : i32
    %24 = tpu.iota {dimensions = array<i32: 1>} : vector<1x132xi32>
    %25 = vector.broadcast %23 : i32 to vector<1x132xi32>
    %26 = arith.addi %25, %24 : vector<1x132xi32>
    %c0_i32 = arith.constant 0 : i32
    %27 = vector.broadcast %c0_i32 : i32 to vector<1x132xi32>
    %28 = arith.cmpi sge, %26, %27 : vector<1x132xi32>
    %c16_i32 = arith.constant 16 : i32
    %29 = vector.broadcast %c16_i32 : i32 to vector<1x132xi32>
    %30 = arith.cmpi slt, %26, %29 : vector<1x132xi32>
    %31 = arith.andi %28, %30 : vector<1x132xi1>
    %cst_11 = arith.constant 0.000000e+00 : f32
    %32 = vector.shape_cast %31 : vector<1x132xi1> to vector<1x132xi1>
    %33 = vector.broadcast %32 : vector<1x132xi1> to vector<8x132xi1>
    %34 = vector.broadcast %cst_11 : f32 to vector<8x132xf32>
    %35 = arith.select %33, %21, %34 : vector<8x132xi1>, vector<8x132xf32>
    %c0_12 = arith.constant 0 : index
    %c0_13 = arith.constant 0 : index
    %36 = vector.load %arg6[%c0_12, %c0_13] : memref<8x24xbf16, #tpu.memory_space<vmem>>, vector<8x24xbf16>
    %37 = arith.truncf %35 : vector<8x132xf32> to vector<8x132xbf16>
    %38 = vector.extract_strided_slice %37 {offsets = [0, 0], sizes = [8, 128], strides = [1, 1]} : vector<8x132xbf16> to vector<8x128xbf16>
    %39 = vector.extract_strided_slice %37 {offsets = [0, 2], sizes = [8, 128], strides = [1, 1]} : vector<8x132xbf16> to vector<8x128xbf16>
    %40 = vector.extract_strided_slice %37 {offsets = [0, 4], sizes = [8, 128], strides = [1, 1]} : vector<8x132xbf16> to vector<8x128xbf16>
    %41 = tpu.concatenate %38, %39, %40 in 0 : vector<8x128xbf16>, vector<8x128xbf16>, vector<8x128xbf16> -> vector<24x128xbf16>
    %cst_14 = arith.constant dense<0.000000e+00> : vector<8x128xf32>
    %42 = tpu.matmul %36, %41, %cst_14 {dimension_numbers = #tpu.dot_dimension_numbers<[1], [0], [0], [1], [0, 0, 1, 1], [], []>} : vector<8x24xbf16>, vector<24x128xbf16>, vector<8x128xf32> -> vector<8x128xf32>
    %c0_15 = arith.constant 0 : index
    %c0_16 = arith.constant 0 : index
    %43 = vector.load %arg7[%c0_15, %c0_16] : memref<8x1xf32, #tpu.memory_space<vmem>>, vector<8x1xf32>
    %44 = vector.broadcast %43 : vector<8x1xf32> to vector<8x128xf32>
    %45 = arith.addf %42, %44 : vector<8x128xf32>
    %cst_17 = arith.constant 0.000000e+00 : f32
    %46 = vector.broadcast %cst_17 : f32 to vector<8x128xf32>
    %47 = arith.cmpf ogt, %45, %46 : vector<8x128xf32>
    %c1 = arith.constant 1 : index
    %48 = memref.load %arg8[%c1] : memref<3xf32, #tpu.memory_space<smem>>
    %49 = vector.broadcast %48 : f32 to vector<8x128xf32>
    %50 = arith.mulf %49, %45 : vector<8x128xf32>
    %51 = arith.select %47, %45, %50 : vector<8x128xi1>, vector<8x128xf32>
    %52 = vector.extract_strided_slice %1 {offsets = [0, 8], sizes = [8, 120], strides = [1, 1]} : vector<8x128xf32> to vector<8x120xf32>
    %53 = vector.extract_strided_slice %3 {offsets = [0, 0], sizes = [8, 8], strides = [1, 1]} : vector<8x128xf32> to vector<8x8xf32>
    %54 = tpu.concatenate %52, %53 in 1 : vector<8x120xf32>, vector<8x8xf32> -> vector<8x128xf32>
    %c0_18 = arith.constant 0 : index
    %c0_19 = arith.constant 0 : index
    %55 = vector.load %arg9[%c0_18, %c0_19] : memref<8x8xbf16, #tpu.memory_space<vmem>>, vector<8x8xbf16>
    %56 = arith.truncf %54 : vector<8x128xf32> to vector<8x128xbf16>
    %cst_20 = arith.constant dense<0.000000e+00> : vector<8x128xf32>
    %57 = tpu.matmul %55, %56, %cst_20 {dimension_numbers = #tpu.dot_dimension_numbers<[1], [0], [0], [1], [0, 0, 1, 1], [], []>} : vector<8x8xbf16>, vector<8x128xbf16>, vector<8x128xf32> -> vector<8x128xf32>
    %c0_21 = arith.constant 0 : index
    %c0_22 = arith.constant 0 : index
    %58 = vector.load %arg10[%c0_21, %c0_22] : memref<8x1xf32, #tpu.memory_space<vmem>>, vector<8x1xf32>
    %59 = vector.broadcast %58 : vector<8x1xf32> to vector<8x128xf32>
    %60 = arith.addf %57, %59 : vector<8x128xf32>
    %61 = arith.addf %51, %60 : vector<8x128xf32>
    %cst_23 = arith.constant 0.000000e+00 : f32
    %62 = vector.broadcast %cst_23 : f32 to vector<8x128xf32>
    %63 = arith.cmpf ogt, %61, %62 : vector<8x128xf32>
    %c2 = arith.constant 2 : index
    %64 = memref.load %arg8[%c2] : memref<3xf32, #tpu.memory_space<smem>>
    %65 = vector.broadcast %64 : f32 to vector<8x128xf32>
    %66 = arith.mulf %65, %61 : vector<8x128xf32>
    %67 = arith.select %63, %61, %66 : vector<8x128xi1>, vector<8x128xf32>
    %c0_24 = arith.constant 0 : index
    %c0_25 = arith.constant 0 : index
    %c0_26 = arith.constant 0 : index
    %68 = vector.load %arg11[%c0_24, %c0_25, %c0_26] : memref<1x8x128xf32, #tpu.memory_space<vmem>>, vector<1x8x128xf32>
    %69 = vector.shape_cast %68 : vector<1x8x128xf32> to vector<8x128xf32>
    %70 = vector.shape_cast %67 : vector<8x128xf32> to vector<1x8x128xf32>
    tpu.vector_store %arg11[%c0_24, %c0_25, %c0_26], %70 {strides = array<i32>} : memref<1x8x128xf32, #tpu.memory_space<vmem>>, vector<1x8x128xf32>,
    return
  }
  func.func @transform_0(%arg0: i32, %arg1: i32) -> (i32, i32, i32) {
    %c0_i32 = arith.constant 0 : i32
    %c0_i32_0 = arith.constant 0 : i32
    return %arg0, %c0_i32, %arg1 : i32, i32, i32
  }
  func.func @transform_1(%arg0: i32, %arg1: i32) -> (i32, i32, i32) {
    %c1_i32 = arith.constant 1 : i32
    %0 = arith.addi %arg1, %c1_i32 : i32
    %c0_i32 = arith.constant 0 : i32
    %c0_i32_0 = arith.constant 0 : i32
    return %arg0, %c0_i32, %0 : i32, i32, i32
  }
  func.func @transform_2(%arg0: i32, %arg1: i32) -> (i32, i32) {
    %c0_i32 = arith.constant 0 : i32
    %c0_i32_0 = arith.constant 0 : i32
    %c0_i32_1 = arith.constant 0 : i32
    return %c0_i32, %c0_i32_0 : i32, i32
  }
  func.func @transform_3(%arg0: i32, %arg1: i32) -> (i32, i32) {
    %c0_i32 = arith.constant 0 : i32
    %c0_i32_0 = arith.constant 0 : i32
    %c0_i32_1 = arith.constant 0 : i32
    return %c0_i32, %c0_i32_0 : i32, i32
  }
  func.func @transform_4(%arg0: i32, %arg1: i32) -> (i32, i32) {
    %c0_i32 = arith.constant 0 : i32
    %c0_i32_0 = arith.constant 0 : i32
    %c0_i32_1 = arith.constant 0 : i32
    return %c0_i32, %c0_i32_0 : i32, i32
  }
  func.func @transform_5(%arg0: i32, %arg1: i32) -> (i32, i32) {
    %c0_i32 = arith.constant 0 : i32
    %c0_i32_0 = arith.constant 0 : i32
    %c0_i32_1 = arith.constant 0 : i32
    return %c0_i32, %c0_i32_0 : i32, i32
  }
  func.func @transform_6(%arg0: i32, %arg1: i32) -> i32 {
    %c0_i32 = arith.constant 0 : i32
    %c0_i32_0 = arith.constant 0 : i32
    return %c0_i32 : i32
  }
  func.func @transform_7(%arg0: i32, %arg1: i32) -> (i32, i32) {
    %c0_i32 = arith.constant 0 : i32
    %c0_i32_0 = arith.constant 0 : i32
    %c0_i32_1 = arith.constant 0 : i32
    return %c0_i32, %c0_i32_0 : i32, i32
  }
  func.func @transform_8(%arg0: i32, %arg1: i32) -> (i32, i32) {
    %c0_i32 = arith.constant 0 : i32
    %c0_i32_0 = arith.constant 0 : i32
    %c0_i32_1 = arith.constant 0 : i32
    return %c0_i32, %c0_i32_0 : i32, i32
  }
  func.func @transform_9(%arg0: i32, %arg1: i32) -> (i32, i32, i32) {
    %c0_i32 = arith.constant 0 : i32
    %c0_i32_0 = arith.constant 0 : i32
    return %arg0, %c0_i32, %arg1 : i32, i32, i32
  }
}

</mosaic_0001>

<llo_original>
// kernel: tpu_custom_call.1
$region0: #{tpu_custom_call.1}
  #allocation0 [shape = 'u32[]', space=smem, size = 0x4, offset = 0x4, fixed_abs, tag = 'smem constant byte address 0x4 - core index']
  #allocation1 [shape = 'u32[72,128]{1,0:T(1,128)}', space=vmem, size = 0x9000, scoped, tag = 'internal scratch']
  %s0 = inlined_call_operand.hbm [shape: f32[2,8,256], index: 0, kind: input, shape index: {}]
  %s1 = inlined_call_operand.hbm [shape: f32[2,8,256], index: 1, kind: input, shape index: {}]
  %s2 = inlined_call_operand.vmem [shape: bf16[8,24], index: 2, kind: input, shape index: {}]
  %s3 = inlined_call_operand.vmem [shape: f32[8,1], index: 3, kind: input, shape index: {}]
  %s4 = inlined_call_operand.vmem [shape: bf16[8,24], index: 4, kind: input, shape index: {}]
  %s5 = inlined_call_operand.vmem [shape: f32[8,1], index: 5, kind: input, shape index: {}]
  %s6 = inlined_call_operand.vmem [shape: f32[3], index: 6, kind: input, shape index: {}]
  %s7 = inlined_call_operand.vmem [shape: bf16[8,8], index: 7, kind: input, shape index: {}]
  %s8 = inlined_call_operand.vmem [shape: f32[8,1], index: 8, kind: input, shape index: {}]
  %s9 = inlined_call_operand.hbm [shape: f32[2,8,128], index: 9, kind: output, shape index: {}]
  %s10 = sld [smem:[#allocation0]]
  $region81: #{tpu_custom_call.1} parent=0
    _
  %s12 = ssub.s32 1, %s10
  %s13 = scalar_select 0, %s12, %s10
  $region1: #{tpu_custom_call.1} parent=0
    #allocation2 [shape = 'u8[8192]{0}', space=vmem, size = 0x2000, scoped, tag = 'input window, operand 0']
    #allocation3 [shape = 's32[2]{0}', space=sflag, size = 0x8, scoped, tag = 'scoped memory for tpu_custom_call.1']
    #allocation4 [shape = 's32[2]{0}', space=sflag, size = 0x8, scoped, tag = 'scoped memory for tpu_custom_call.1']
    #allocation5 [shape = 's32[2]{0}', space=sflag, size = 0x8, scoped, tag = 'scoped memory for tpu_custom_call.1']
    #allocation6 [shape = 'u8[8192]{0}', space=vmem, size = 0x2000, scoped, tag = 'input window, operand 1']
    #allocation7 [shape = 's32[2]{0}', space=sflag, size = 0x8, scoped, tag = 'scoped memory for tpu_custom_call.1']
    #allocation8 [shape = 'u8[512]{0}', space=smem, size = 0x200, scoped, tag = 'input window, operand 6, single buffered']
    #allocation9 [shape = 'u8[8192]{0}', space=vmem, size = 0x2000, scoped, tag = 'output window, operand 0']
    %14 = vsyncpa [#allocation3], 0
    %s15 = scalar_lea.sflag [#allocation3], 1
    %16 = vsyncpa %s15, 0
    %17 = vsyncpa [#allocation7], 0
    %s18 = scalar_lea.sflag [#allocation7], 1
    %19 = vsyncpa %s18, 0
    %20 = vsyncpa [#allocation5], 0
    %21 = vsyncpa [#allocation4], 0
    %s22 = scalar_lea.sflag [#allocation4], 1
    %23 = vsyncpa %s22, 0
    loop: start=0, step=1, limit=4
    $region2: #{tpu_custom_call.1} parent=1 // loop_pre_header
      _
    $region3: #{tpu_custom_call.1} parent=1 // loop_header
      %s25 = sphi 0, %s29
      %p26 = scmp.ge.s32.totalorder %s25, 4
      %s32 = sphi 0, %s44
      %s33 = sphi 0, %s40
      %s34 = sphi 0, %s32
      %s35 = sphi 0, %s33
      %s36 = sphi 0, %s34
      %s37 = sphi 0, %s35
      %s49 = sphi 0, %s51
      %s52 = sphi 0, %s49
      %s53 = sphi 0, %s52
      %s69 = sphi 0, %s53
      %s79 = sphi 0, %s81
      %s82 = sphi 0, %s79
      %s83 = sphi 0, %s82
      %s99 = sphi 0, %s83
      %s103 = sphi 0, %s103
      %s105 = sphi 0, %s103
      %s106 = sphi 0, %s105
      %s120 = sphi 0, %s106
      %s124 = sphi 0, %s124
      %s126 = sphi 0, %s124
      %s127 = sphi 0, %s126
      %s141 = sphi 0, %s127
      %s145 = sphi 0, %s145
      %s147 = sphi 0, %s145
      %s148 = sphi 0, %s147
      %s162 = sphi 0, %s148
      %s166 = sphi 0, %s166
      %s168 = sphi 0, %s166
      %s169 = sphi 0, %s168
      %s183 = sphi 0, %s169
      %s187 = sphi 0, %s187
      %s189 = sphi 0, %s187
      %s190 = sphi 0, %s189
      %s204 = sphi 0, %s190
      %s208 = sphi 0, %s208
      %s210 = sphi 0, %s208
      %s211 = sphi 0, %s210
      %s225 = sphi 0, %s211
      %s229 = sphi 0, %s229
      %s231 = sphi 0, %s229
      %s232 = sphi 0, %s231
      %s246 = sphi 0, %s232
      %s254 = sphi 0, %s256
      %s257 = sphi 0, %s254
      %s258 = sphi 0, %s257
      %s274 = sphi 0, %s258
    $region4: #{tpu_custom_call.1} parent=1 // loop_header_branch
      %28 = sbr.rel (%p26) target = $region8
    $region5: #{tpu_custom_call.1} parent=1 // loop_body
      %s30 = ssub.s32 %s25, 1
      %s31 = ssub.s32 %s25, 2
      %s38 = sadd.s32 1, %s33
      %p39 = scmp.ge.s32.totalorder %s38, 1
      %s40 = scalar_select %p39, 0, %s38
      %s41 = sadd.s32 1, %s32
      %s42 = scalar_select %p39, %s41, %s32
      %p43 = scmp.ge.s32.totalorder %s42, 2
      %s44 = scalar_select %p43, 0, %s42
      %s45 = ssub.s32 %s32, %s44
      %s46 = ssub.s32 %s33, %s40
      %s47 = sor.u32 %s45, %s46
      %p48 = scmp.eq.s32.totalorder %s47, 0
      %s50 = sadd.s32 %s49, 1
      %s51 = scalar_select %p48, %s49, %s50
      %p54 = pneg %p48
      %p55 = scmp.eq.s32.totalorder %s25, 1
      %p56 = por %p54, %p55
      %p57 = scmp.ne.s32.totalorder %s49, %s52
      %p58 = scmp.eq.s32.totalorder %s25, 0
      %p59 = por %p57, %p58
      %p60 = scmp.ne.s32.totalorder %s49, %s52
      %p61 = scmp.eq.s32.totalorder %s30, 1
      %p62 = por %p60, %p61
      %p63 = scmp.ne.s32.totalorder %s52, %s53
      %p64 = scmp.eq.s32.totalorder %s30, 0
      %p65 = por %p63, %p64
      %p66 = scmp.ne.s32.totalorder %s52, %s53
      %p67 = scmp.eq.s32.totalorder %s31, 1
      %p68 = por %p66, %p67
      %p70 = scmp.ne.s32.totalorder %s53, %s69
      %p71 = scmp.eq.s32.totalorder %s31, 0
      %p72 = por %p70, %p71
      %s73 = sadd.s32 %s33, 1
      %s74 = sadd.s32 %s40, 1
      %s75 = ssub.s32 %s32, %s44
      %s76 = ssub.s32 %s73, %s74
      %s77 = sor.u32 %s75, %s76
      %p78 = scmp.eq.s32.totalorder %s77, 0
      %s80 = sadd.s32 %s79, 1
      %s81 = scalar_select %p78, %s79, %s80
      %p84 = pneg %p78
      %p85 = scmp.eq.s32.totalorder %s25, 1
      %p86 = por %p84, %p85
      %p87 = scmp.ne.s32.totalorder %s79, %s82
      %p88 = scmp.eq.s32.totalorder %s25, 0
      %p89 = por %p87, %p88
      %p90 = scmp.ne.s32.totalorder %s79, %s82
      %p91 = scmp.eq.s32.totalorder %s30, 1
      %p92 = por %p90, %p91
      %p93 = scmp.ne.s32.totalorder %s82, %s83
      %p94 = scmp.eq.s32.totalorder %s30, 0
      %p95 = por %p93, %p94
      %p96 = scmp.ne.s32.totalorder %s82, %s83
      %p97 = scmp.eq.s32.totalorder %s31, 1
      %p98 = por %p96, %p97
      %p100 = scmp.ne.s32.totalorder %s83, %s99
      %p101 = scmp.eq.s32.totalorder %s31, 0
      %p102 = por %p100, %p101
      %s104 = sadd.s32 %s103, 1
      %p107 = scmp.eq.s32.totalorder %s25, 1
      %p108 = scmp.ne.s32.totalorder %s103, %s105
      %p109 = scmp.eq.s32.totalorder %s25, 0
      %p110 = por %p108, %p109
      %p111 = scmp.ne.s32.totalorder %s103, %s105
      %p112 = scmp.eq.s32.totalorder %s30, 1
      %p113 = por %p111, %p112
      %p114 = scmp.ne.s32.totalorder %s105, %s106
      %p115 = scmp.eq.s32.totalorder %s30, 0
      %p116 = por %p114, %p115
      %p117 = scmp.ne.s32.totalorder %s105, %s106
      %p118 = scmp.eq.s32.totalorder %s31, 1
      %p119 = por %p117, %p118
      %p121 = scmp.ne.s32.totalorder %s106, %s120
      %p122 = scmp.eq.s32.totalorder %s31, 0
      %p123 = por %p121, %p122
      %s125 = sadd.s32 %s124, 1
      %p128 = scmp.eq.s32.totalorder %s25, 1
      %p129 = scmp.ne.s32.totalorder %s124, %s126
      %p130 = scmp.eq.s32.totalorder %s25, 0
      %p131 = por %p129, %p130
      %p132 = scmp.ne.s32.totalorder %s124, %s126
      %p133 = scmp.eq.s32.totalorder %s30, 1
      %p134 = por %p132, %p133
      %p135 = scmp.ne.s32.totalorder %s126, %s127
      %p136 = scmp.eq.s32.totalorder %s30, 0
      %p137 = por %p135, %p136
      %p138 = scmp.ne.s32.totalorder %s126, %s127
      %p139 = scmp.eq.s32.totalorder %s31, 1
      %p140 = por %p138, %p139
      %p142 = scmp.ne.s32.totalorder %s127, %s141
      %p143 = scmp.eq.s32.totalorder %s31, 0
      %p144 = por %p142, %p143
      %s146 = sadd.s32 %s145, 1
      %p149 = scmp.eq.s32.totalorder %s25, 1
      %p150 = scmp.ne.s32.totalorder %s145, %s147
      %p151 = scmp.eq.s32.totalorder %s25, 0
      %p152 = por %p150, %p151
      %p153 = scmp.ne.s32.totalorder %s145, %s147
      %p154 = scmp.eq.s32.totalorder %s30, 1
      %p155 = por %p153, %p154
      %p156 = scmp.ne.s32.totalorder %s147, %s148
      %p157 = scmp.eq.s32.totalorder %s30, 0
      %p158 = por %p156, %p157
      %p159 = scmp.ne.s32.totalorder %s147, %s148
      %p160 = scmp.eq.s32.totalorder %s31, 1
      %p161 = por %p159, %p160
      %p163 = scmp.ne.s32.totalorder %s148, %s162
      %p164 = scmp.eq.s32.totalorder %s31, 0
      %p165 = por %p163, %p164
      %s167 = sadd.s32 %s166, 1
      %p170 = scmp.eq.s32.totalorder %s25, 1
      %p171 = scmp.ne.s32.totalorder %s166, %s168
      %p172 = scmp.eq.s32.totalorder %s25, 0
      %p173 = por %p171, %p172
      %p174 = scmp.ne.s32.totalorder %s166, %s168
      %p175 = scmp.eq.s32.totalorder %s30, 1
      %p176 = por %p174, %p175
      %p177 = scmp.ne.s32.totalorder %s168, %s169
      %p178 = scmp.eq.s32.totalorder %s30, 0
      %p179 = por %p177, %p178
      %p180 = scmp.ne.s32.totalorder %s168, %s169
      %p181 = scmp.eq.s32.totalorder %s31, 1
      %p182 = por %p180, %p181
      %p184 = scmp.ne.s32.totalorder %s169, %s183
      %p185 = scmp.eq.s32.totalorder %s31, 0
      %p186 = por %p184, %p185
      %s188 = sadd.s32 %s187, 1
      %p191 = scmp.eq.s32.totalorder %s25, 1
      %p192 = scmp.ne.s32.totalorder %s187, %s189
      %p193 = scmp.eq.s32.totalorder %s25, 0
      %p194 = por %p192, %p193
      %p195 = scmp.ne.s32.totalorder %s187, %s189
      %p196 = scmp.eq.s32.totalorder %s30, 1
      %p197 = por %p195, %p196
      %p198 = scmp.ne.s32.totalorder %s189, %s190
      %p199 = scmp.eq.s32.totalorder %s30, 0
      %p200 = por %p198, %p199
      %p201 = scmp.ne.s32.totalorder %s189, %s190
      %p202 = scmp.eq.s32.totalorder %s31, 1
      %p203 = por %p201, %p202
      %p205 = scmp.ne.s32.totalorder %s190, %s204
      %p206 = scmp.eq.s32.totalorder %s31, 0
      %p207 = por %p205, %p206
      %s209 = sadd.s32 %s208, 1
      %p212 = scmp.eq.s32.totalorder %s25, 1
      %p213 = scmp.ne.s32.totalorder %s208, %s210
      %p214 = scmp.eq.s32.totalorder %s25, 0
      %p215 = por %p213, %p214
      %p216 = scmp.ne.s32.totalorder %s208, %s210
      %p217 = scmp.eq.s32.totalorder %s30, 1
      %p218 = por %p216, %p217
      %p219 = scmp.ne.s32.totalorder %s210, %s211
      %p220 = scmp.eq.s32.totalorder %s30, 0
      %p221 = por %p219, %p220
      %p222 = scmp.ne.s32.totalorder %s210, %s211
      %p223 = scmp.eq.s32.totalorder %s31, 1
      %p224 = por %p222, %p223
      %p226 = scmp.ne.s32.totalorder %s211, %s225
      %p227 = scmp.eq.s32.totalorder %s31, 0
      %p228 = por %p226, %p227
      %s230 = sadd.s32 %s229, 1
      %p233 = scmp.eq.s32.totalorder %s25, 1
      %p234 = scmp.ne.s32.totalorder %s229, %s231
      %p235 = scmp.eq.s32.totalorder %s25, 0
      %p236 = por %p234, %p235
      %p237 = scmp.ne.s32.totalorder %s229, %s231
      %p238 = scmp.eq.s32.totalorder %s30, 1
      %p239 = por %p237, %p238
      %p240 = scmp.ne.s32.totalorder %s231, %s232
      %p241 = scmp.eq.s32.totalorder %s30, 0
      %p242 = por %p240, %p241
      %p243 = scmp.ne.s32.totalorder %s231, %s232
      %p244 = scmp.eq.s32.totalorder %s31, 1
      %p245 = por %p243, %p244
      %p247 = scmp.ne.s32.totalorder %s232, %s246
      %p248 = scmp.eq.s32.totalorder %s31, 0
      %p249 = por %p247, %p248
      %s250 = ssub.s32 %s32, %s44
      %s251 = ssub.s32 %s33, %s40
      %s252 = sor.u32 %s250, %s251
      %p253 = scmp.eq.s32.totalorder %s252, 0
      %s255 = sadd.s32 %s254, 1
      %s256 = scalar_select %p253, %s254, %s255
      %p259 = pneg %p253
      %p260 = scmp.eq.s32.totalorder %s25, 1
      %p261 = por %p259, %p260
      %p262 = scmp.ne.s32.totalorder %s254, %s257
      %p263 = scmp.eq.s32.totalorder %s25, 0
      %p264 = por %p262, %p263
      %p265 = scmp.ne.s32.totalorder %s254, %s257
      %p266 = scmp.eq.s32.totalorder %s30, 1
      %p267 = por %p265, %p266
      %p268 = scmp.ne.s32.totalorder %s257, %s258
      %p269 = scmp.eq.s32.totalorder %s30, 0
      %p270 = por %p268, %p269
      %p271 = scmp.ne.s32.totalorder %s257, %s258
      %p272 = scmp.eq.s32.totalorder %s31, 1
      %p273 = por %p271, %p272
      %p275 = scmp.ne.s32.totalorder %s258, %s274
      %p276 = scmp.eq.s32.totalorder %s31, 0
      %p277 = por %p275, %p276
      %p278 = scmp.le.s32.totalorder 1, %s25
      %p279 = scmp.lt.s32.totalorder %s25, 3
      %p280 = pnand %p278, %p279
      %p281 = pneg %p280
      // Predicated region
      $region9: #{tpu_custom_call.1} parent=5 // pred_check
        _
      $region10: #{tpu_custom_call.1} parent=5 // pred_check_branch
        %283 = sbr.rel (%p280) target = $region12
      $region11: #{tpu_custom_call.1} parent=5 // pred_region
        %s284 = ssub.s32 %s25, 1
        // Predicated region
        $region13: #{tpu_custom_call.1} parent=11 // pred_check
          %p285 = pneg %p116
        $region14: #{tpu_custom_call.1} parent=11 // pred_check_branch
          %287 = sbr.rel (%p285) target = $region16
        $region15: #{tpu_custom_call.1} parent=11 // pred_region
          _
        $region16: #{tpu_custom_call.1} parent=11 // pred_fallthru
          _
        // Predicated region
        $region17: #{tpu_custom_call.1} parent=11 // pred_check
          %p288 = pneg %p137
        $region18: #{tpu_custom_call.1} parent=11 // pred_check_branch
          %290 = sbr.rel (%p288) target = $region20
        $region19: #{tpu_custom_call.1} parent=11 // pred_region
          _
        $region20: #{tpu_custom_call.1} parent=11 // pred_fallthru
          _
        // Predicated region
        $region21: #{tpu_custom_call.1} parent=11 // pred_check
          %p291 = pneg %p158
        $region22: #{tpu_custom_call.1} parent=11 // pred_check_branch
          %293 = sbr.rel (%p291) target = $region24
        $region23: #{tpu_custom_call.1} parent=11 // pred_region
          _
        $region24: #{tpu_custom_call.1} parent=11 // pred_fallthru
          _
        // Predicated region
        $region25: #{tpu_custom_call.1} parent=11 // pred_check
          %p294 = pneg %p179
        $region26: #{tpu_custom_call.1} parent=11 // pred_check_branch
          %296 = sbr.rel (%p294) target = $region28
        $region27: #{tpu_custom_call.1} parent=11 // pred_region
          _
        $region28: #{tpu_custom_call.1} parent=11 // pred_fallthru
          _
        // Predicated region
        $region29: #{tpu_custom_call.1} parent=11 // pred_check
          %p297 = pneg %p200
        $region30: #{tpu_custom_call.1} parent=11 // pred_check_branch
          %299 = sbr.rel (%p297) target = $region32
        $region31: #{tpu_custom_call.1} parent=11 // pred_region
          %301 = vsyncadd [#allocation5], 0
          %s303 = sshll.u32 %s6, 4
          %s304 = int_to_ptr.vmem [resolvable:$true] %s303
          %306 = dma.vmem_to_smem %s304, 16, [#allocation8], [#allocation5]
        $region32: #{tpu_custom_call.1} parent=11 // pred_fallthru
          _
        // Predicated region
        $region33: #{tpu_custom_call.1} parent=11 // pred_check
          %p307 = pneg %p221
        $region34: #{tpu_custom_call.1} parent=11 // pred_check_branch
          %309 = sbr.rel (%p307) target = $region36
        $region35: #{tpu_custom_call.1} parent=11 // pred_region
          _
        $region36: #{tpu_custom_call.1} parent=11 // pred_fallthru
          _
        // Predicated region
        $region37: #{tpu_custom_call.1} parent=11 // pred_check
          %p310 = pneg %p242
        $region38: #{tpu_custom_call.1} parent=11 // pred_check_branch
          %312 = sbr.rel (%p310) target = $region40
        $region39: #{tpu_custom_call.1} parent=11 // pred_region
          _
        $region40: #{tpu_custom_call.1} parent=11 // pred_fallthru
          _
      $region12: #{tpu_custom_call.1} parent=5 // pred_fallthru
        _
      %p313 = scmp.lt.s32.totalorder %s25, 2
      // Predicated region
      $region41: #{tpu_custom_call.1} parent=5 // pred_check
        %p314 = pneg %p313
      $region42: #{tpu_custom_call.1} parent=5 // pred_check_branch
        %316 = sbr.rel (%p314) target = $region44
      $region43: #{tpu_custom_call.1} parent=5 // pred_region
        // Predicated region
        $region45: #{tpu_custom_call.1} parent=43 // pred_check
          %p317 = pneg %p59
        $region46: #{tpu_custom_call.1} parent=43 // pred_check_branch
          %319 = sbr.rel (%p317) target = $region48
        $region47: #{tpu_custom_call.1} parent=43 // pred_region
          %s320 = sand.u32 %s49, 1
          %s321 = scalar_lea.sflag [#allocation3], %s320
          %s322 = sand.u32 %s49, 1
          %s323 = smul.addr %s322, 8
          %s324 = scalar_lea.vmem [#allocation2], %s323
          %326 = vsyncadd %s321, 0
          %s327 = smul.addr %s32, 2
          %s328 = sadd.s32 %s33, %s327
          %s329 = smul.addr %s328, 8
          %s330 = scalar_lea.hbm %s0, %s329
          %s332 = sshll.u32 %s330, 4
          %s333 = int_to_ptr.hbm [resolvable:$true] %s332
          %s334 = sshll.u32 %s324, 4
          %s335 = int_to_ptr.vmem [resolvable:$true] %s334
          %337 = dma.hbm_to_vmem [thread:$0]  %s333, 128, %s335, %s321
        $region48: #{tpu_custom_call.1} parent=43 // pred_fallthru
          _
        // Predicated region
        $region49: #{tpu_custom_call.1} parent=43 // pred_check
          %p338 = pneg %p89
        $region50: #{tpu_custom_call.1} parent=43 // pred_check_branch
          %340 = sbr.rel (%p338) target = $region52
        $region51: #{tpu_custom_call.1} parent=43 // pred_region
          %s341 = sand.u32 %s79, 1
          %s342 = scalar_lea.sflag [#allocation7], %s341
          %s343 = sand.u32 %s79, 1
          %s344 = smul.addr %s343, 8
          %s345 = scalar_lea.vmem [#allocation6], %s344
          %s346 = sadd.s32 %s33, 1
          %348 = vsyncadd %s342, 0
          %s349 = smul.addr %s32, 2
          %s350 = sadd.s32 %s346, %s349
          %s351 = smul.addr %s350, 8
          %s352 = scalar_lea.hbm %s1, %s351
          %s354 = sshll.u32 %s352, 4
          %s355 = int_to_ptr.hbm [resolvable:$true] %s354
          %s356 = sshll.u32 %s345, 4
          %s357 = int_to_ptr.vmem [resolvable:$true] %s356
          %359 = dma.hbm_to_vmem [thread:$0]  %s355, 128, %s357, %s342
        $region52: #{tpu_custom_call.1} parent=43 // pred_fallthru
          _
      $region44: #{tpu_custom_call.1} parent=5 // pred_fallthru
        _
      %p360 = scmp.le.s32.totalorder 1, %s25
      %p361 = scmp.lt.s32.totalorder %s25, 3
      %p362 = pnand %p360, %p361
      %p363 = pneg %p362
      // Predicated region
      $region53: #{tpu_custom_call.1} parent=5 // pred_check
        _
      $region54: #{tpu_custom_call.1} parent=5 // pred_check_branch
        %365 = sbr.rel (%p362) target = $region56
      $region55: #{tpu_custom_call.1} parent=5 // pred_region
        %s366 = ssub.s32 %s25, 1
        %s367 = sand.u32 %s52, 1
        %s368 = scalar_lea.sflag [#allocation3], %s367
        %s369 = sand.u32 %s52, 1
        %s370 = smul.addr %s369, 8
        %s371 = scalar_lea.vmem [#allocation2], %s370
        // Predicated region
        $region57: #{tpu_custom_call.1} parent=55 // pred_check
          %p372 = pneg %p65
        $region58: #{tpu_custom_call.1} parent=55 // pred_check_branch
          %374 = sbr.rel (%p372) target = $region60
        $region59: #{tpu_custom_call.1} parent=55 // pred_region
          %376 = dma.done %s368, 128
        $region60: #{tpu_custom_call.1} parent=55 // pred_fallthru
          _
        %s377 = sand.u32 %s82, 1
        %s378 = scalar_lea.sflag [#allocation7], %s377
        %s379 = sand.u32 %s82, 1
        %s380 = smul.addr %s379, 8
        %s381 = scalar_lea.vmem [#allocation6], %s380
        // Predicated region
        $region61: #{tpu_custom_call.1} parent=55 // pred_check
          %p382 = pneg %p95
        $region62: #{tpu_custom_call.1} parent=55 // pred_check_branch
          %384 = sbr.rel (%p382) target = $region64
        $region63: #{tpu_custom_call.1} parent=55 // pred_region
          %386 = dma.done %s378, 128
        $region64: #{tpu_custom_call.1} parent=55 // pred_fallthru
          _
        // Predicated region
        $region65: #{tpu_custom_call.1} parent=55 // pred_check
          %p387 = pneg %p200
        $region66: #{tpu_custom_call.1} parent=55 // pred_check_branch
          %389 = sbr.rel (%p387) target = $region68
        $region67: #{tpu_custom_call.1} parent=55 // pred_region
          %391 = dma.done [#allocation5], 16
        $region68: #{tpu_custom_call.1} parent=55 // pred_fallthru
          _
        %392 = sfence
        %s393 = sand.u32 %s52, 1
        %s394 = scalar_lea.sflag [#allocation3], %s393
        %s395 = sand.u32 %s52, 1
        %s396 = smul.addr %s395, 8
        %s397 = scalar_lea.vmem [#allocation2], %s396
        %p398 = pneg %p65
        %p399 = pneg %p62
        %s400 = sand.u32 %s82, 1
        %s401 = scalar_lea.sflag [#allocation7], %s400
        %s402 = sand.u32 %s82, 1
        %s403 = smul.addr %s402, 8
        %s404 = scalar_lea.vmem [#allocation6], %s403
        %p405 = pneg %p95
        %p406 = pneg %p92
        %p407 = pneg %p116
        %p408 = pneg %p113
        %p409 = pneg %p137
        %p410 = pneg %p134
        %p411 = pneg %p158
        %p412 = pneg %p155
        %p413 = pneg %p179
        %p414 = pneg %p176
        %p415 = pneg %p200
        %p416 = pneg %p197
        %p417 = pneg %p221
        %p418 = pneg %p218
        %p419 = pneg %p242
        %p420 = pneg %p239
        %p421 = pneg %p270
        %p422 = pneg %p267
        %s423 = sand.u32 %s257, 1
        %s424 = scalar_lea.sflag [#allocation4], %s423
        %s425 = sand.u32 %s257, 1
        %s426 = smul.addr %s425, 8
        %s427 = scalar_lea.vmem [#allocation9], %s426
        %s428 = sadd.s32 %s35, 1
        %v430 = vld [vmem:[%s371] sm:$0xff]
        %v431 = vld [vmem:[%s381] sm:$0xff]
        %v432 = vpack.c.bf16 %v430, %v430
        %v433 = vpack.c.bf16 %v431, %v431
        %v434 = vld [vmem:[%s2] sm:$0xf]
        %v437 = vrot.slane %v432, 4
        %v438 = vrot.slane %v433, 4
        %439 = vrot.lane.b32.xlu0 %v437, 126
        %v440 = vpop.permute.xlu0 %439
        %441 = vrot.lane.b32.xlu0 %v438, 126
        %v442 = vpop.permute.xlu0 %441
        %vm443 = vcmask 1031168
        %v444 = vsel %vm443, %v440, %v442
        %445 = vrot.lane.b32.xlu0 %v432, 124
        %v446 = vpop.permute.xlu0 %445
        %447 = vrot.lane.b32.xlu0 %v433, 124
        %v448 = vpop.permute.xlu0 %447
        %vm449 = vcmask 1014784
        %v450 = vsel %vm449, %v446, %v448
        %vm451 = vcmask 1043456
        %v454 = vsel %vm451, %v432, %v444
        %v458 = vsel %vm451, %v433, %v442
        %v460 = vld [vmem:[%s3] sm:$0xff]
        %462 = vset.pattern.permute.xlu0 0
        %463 = vperm.xlu0 %462, %v460
        %v464 = vpop.permute.xlu0 %463
        %vm466 = vcmask 195584
        %v468 = vsel %vm466, %v434, 0
        %v471 = vsel %vm451, %v450, 0
        %v474 = vsel %vm451, %v448, 0
        %476 = vmatpush.bf16.msra.mxu0 0
        %477 = vmatpush.bf16.msra.mxu0 0
        %478 = vmatpush.bf16.msra.mxu0 0
        %479 = vmatpush.bf16.msra.mxu0 0
        %480 = vmatpush.bf16.msra.mxu0 0
        %481 = vmatpush.bf16.msra.mxu0 0
        %482 = vmatpush.bf16.msra.mxu0 %v471
        %483 = vmatpush.bf16.msra.mxu0 %v454
        %484 = vmatmul.bf16.gmra.mxu0 %v468
        %v485 = vpop.f32.mrf.mxu0
        %v486 = vadd.f32 %v464, %v485
        %v487 = vpop.f32.mrf.mxu0
        %488 = vdwg.mxu0
        %489 = vmatpush.bf16.msra.mxu0 0
        %490 = vmatpush.bf16.msra.mxu0 0
        %491 = vmatpush.bf16.msra.mxu0 0
        %492 = vmatpush.bf16.msra.mxu0 0
        %493 = vmatpush.bf16.msra.mxu0 0
        %494 = vmatpush.bf16.msra.mxu0 0
        %495 = vmatpush.bf16.msra.mxu0 %v474
        %496 = vmatpush.bf16.msra.mxu0 %v458
        %497 = vmatmul.bf16.gmra.mxu0 %v468
        %v498 = vpop.f32.mrf.mxu0
        %v499 = vadd.f32 %v464, %v498
        %v500 = vpop.f32.mrf.mxu0
        %501 = vdwg.mxu0
        %vm502 = vcmp.gt.f32.partialorder %v486, 0.0
        %vm503 = vcmp.gt.f32.partialorder %v499, 0.0
        %s504 = sld [smem:[#allocation8]]
        %v505 = vstv %s504
        %v506 = vmul.f32 %v505, %v486
        %v507 = vmul.f32 %v505, %v499
        %v508 = vsel %vm502, %v486, %v506
        %v509 = vsel %vm503, %v499, %v507
        %s510 = smul.u32 %s35, 128
        %s511 = ssub.s32 %s510, 4
        %v512 = vlaneseq
        %v513 = vand.u32 %v512, 127
        %v514 = vadd.s32 %v513, 128
        %v515 = vstv %s511
        %v516 = vadd.s32 %v515, %v513
        %v517 = vadd.s32 %v515, %v514
        %vm518 = vcmp.ge.s32.totalorder %v516, 0
        %vm519 = vcmp.ge.s32.totalorder %v517, 0
        %vm520 = vcmp.lt.s32.totalorder %v516, 16
        %vm521 = vcmp.lt.s32.totalorder %v517, 16
        %vm522 = vmand %vm518, %vm520
        %vm523 = vmand %vm519, %vm521
        %v524 = vsel %vm522, 1, 0
        %v525 = vsel %vm523, 1, 0
        %vm526 = vcmp.eq.s32.totalorder %v524, 1
        %vm527 = vcmp.eq.s32.totalorder %v525, 1
        %v528 = vsel %vm526, %v508, 0.0
        %v529 = vsel %vm527, %v509, 0.0
        %v530 = vld [vmem:[%s4] sm:$0xf]
        %v531 = vpack.c.bf16 %v529, %v528
        %v533 = vunpack.c.l.b16 %v531
        %v534 = vunpack.c.h.b16 %v531
        %v535 = vpack.c.b16 %v533, %v533
        %v536 = vpack.c.b16 %v534, %v534
        %537 = vrot.lane.b32.xlu0 %v535, 126
        %v538 = vpop.permute.xlu0 %537
        %539 = vrot.lane.b32.xlu0 %v536, 126
        %v540 = vpop.permute.xlu0 %539
        %v541 = vsel %vm443, %v538, %v540
        %542 = vrot.lane.b32.xlu0 %v535, 124
        %v543 = vpop.permute.xlu0 %542
        %544 = vrot.lane.b32.xlu0 %v536, 124
        %v545 = vpop.permute.xlu0 %544
        %v546 = vsel %vm449, %v543, %v545
        %v549 = vsel %vm451, %v531, %v541
        %v551 = vld [vmem:[%s5] sm:$0xff]
        %553 = vset.pattern.permute.xlu0 0
        %554 = vperm.xlu0 %553, %v551
        %v555 = vpop.permute.xlu0 %554
        %v558 = vsel %vm466, %v530, 0
        %v561 = vsel %vm451, %v546, 0
        %563 = vmatpush.bf16.msra.mxu0 0
        %564 = vmatpush.bf16.msra.mxu0 0
        %565 = vmatpush.bf16.msra.mxu0 0
        %566 = vmatpush.bf16.msra.mxu0 0
        %567 = vmatpush.bf16.msra.mxu0 0
        %568 = vmatpush.bf16.msra.mxu0 0
        %569 = vmatpush.bf16.msra.mxu0 %v561
        %570 = vmatpush.bf16.msra.mxu0 %v549
        %571 = vmatmul.bf16.gmra.mxu0 %v558
        %v572 = vpop.f32.mrf.mxu0
        %v573 = vadd.f32 %v555, %v572
        %v574 = vpop.f32.mrf.mxu0
        %575 = vdwg.mxu0
        %vm576 = vcmp.gt.f32.partialorder %v573, 0.0
        %s577 = sld [smem:[#allocation8 + $0x1]]
        %v578 = vstv %s577
        %v579 = vmul.f32 %v578, %v573
        %v580 = vsel %vm576, %v573, %v579
        %582 = vrot.lane.b32.xlu0 %v430, 120
        %v583 = vpop.permute.xlu0 %582
        %586 = vrot.lane.b32.xlu0 %v431, 120
        %v587 = vpop.permute.xlu0 %586
        %vm589 = vcmask 982016
        %v590 = vsel %vm589, %v583, %v587
        %v591 = vld [vmem:[%s7] sm:$0xf]
        %v592 = vpack.c.bf16 %v590, %v590
        %v593 = vld [vmem:[%s8] sm:$0xff]
        %595 = vset.pattern.permute.xlu0 0
        %596 = vperm.xlu0 %595, %v593
        %v597 = vpop.permute.xlu0 %596
        %vm599 = vcmask 64512
        %v601 = vsel %vm599, %v591, 0
        %v604 = vsel %vm451, %v592, 0
        %606 = vmatpush.bf16.msra.mxu0 0
        %607 = vmatpush.bf16.msra.mxu0 0
        %608 = vmatpush.bf16.msra.mxu0 0
        %609 = vmatpush.bf16.msra.mxu0 0
        %610 = vmatpush.bf16.msra.mxu0 0
        %611 = vmatpush.bf16.msra.mxu0 0
        %612 = vmatpush.bf16.msra.mxu0 0
        %613 = vmatpush.bf16.msra.mxu0 %v604
        %614 = vmatmul.bf16.gmra.mxu0 %v601
        %v615 = vpop.f32.mrf.mxu0
        %v616 = vadd.f32 %v597, %v615
        %v617 = vpop.f32.mrf.mxu0
        %618 = vdwg.mxu0
        %v619 = vadd.f32 %v580, %v616
        %vm620 = vcmp.gt.f32.partialorder %v619, 0.0
        %s621 = sld [smem:[#allocation8 + $0x2]]
        %v622 = vstv %s621
        %v623 = vmul.f32 %v622, %v619
        %v624 = vsel %vm620, %v619, %v623
        %625 = vst [vmem:[%s427] sm:$0xff] %v624
        %s626 = sand.u32 %s257, 1
        %s627 = scalar_lea.sflag [#allocation4], %s626
        %s628 = sand.u32 %s257, 1
        %s629 = smul.addr %s628, 8
        %s630 = scalar_lea.vmem [#allocation9], %s629
        // Predicated region
        $region69: #{tpu_custom_call.1} parent=55 // pred_check
          %p631 = pneg %p267
        $region70: #{tpu_custom_call.1} parent=55 // pred_check_branch
          %633 = sbr.rel (%p631) target = $region72
        $region71: #{tpu_custom_call.1} parent=55 // pred_region
          %635 = vsyncadd %s627, 0
          %s636 = sadd.s32 %s35, %s34
          %s637 = smul.addr %s636, 8
          %s638 = scalar_lea.hbm %s9, %s637
          %s640 = sshll.u32 %s630, 4
          %s641 = int_to_ptr.vmem [resolvable:$true] %s640
          %s642 = sshll.u32 %s638, 4
          %s643 = int_to_ptr.hbm [resolvable:$true] %s642
          %645 = dma.vmem_to_hbm [thread:$0]  %s641, 128, %s643, %s627
        $region72: #{tpu_custom_call.1} parent=55 // pred_fallthru
          _
      $region56: #{tpu_custom_call.1} parent=5 // pred_fallthru
        _
      %p646 = scmp.le.s32.totalorder 2, %s25
      // Predicated region
      $region73: #{tpu_custom_call.1} parent=5 // pred_check
        %p647 = pneg %p646
      $region74: #{tpu_custom_call.1} parent=5 // pred_check_branch
        %649 = sbr.rel (%p647) target = $region76
      $region75: #{tpu_custom_call.1} parent=5 // pred_region
        %s650 = ssub.s32 %s25, 2
        // Predicated region
        $region77: #{tpu_custom_call.1} parent=75 // pred_check
          %p651 = pneg %p273
        $region78: #{tpu_custom_call.1} parent=75 // pred_check_branch
          %653 = sbr.rel (%p651) target = $region80
        $region79: #{tpu_custom_call.1} parent=75 // pred_region
          %s654 = sand.u32 %s258, 1
          %s655 = scalar_lea.sflag [#allocation4], %s654
          %s656 = sand.u32 %s258, 1
          %s657 = smul.addr %s656, 8
          %s658 = scalar_lea.vmem [#allocation9], %s657
          %660 = dma.done %s655, 128
        $region80: #{tpu_custom_call.1} parent=75 // pred_fallthru
          _
      $region76: #{tpu_custom_call.1} parent=5 // pred_fallthru
        _
    $region6: #{tpu_custom_call.1} parent=1 // loop_footer
      %s29 = sadd.s32 1, %s25
    $region7: #{tpu_custom_call.1} parent=1 // loop_footer_branch
      %24 = sbr.rel target = $region3
    $region8: #{tpu_custom_call.1} parent=1 // loop_exit
      _
    %661 = vsyncpa [#allocation3], 1
    %s662 = scalar_lea.sflag [#allocation3], 1
    %663 = vsyncpa %s662, 1
    %664 = vsyncpa [#allocation7], 1
    %s665 = scalar_lea.sflag [#allocation7], 1
    %666 = vsyncpa %s665, 1
    %667 = vsyncpa [#allocation4], 1
    %s668 = scalar_lea.sflag [#allocation4], 1
    %669 = vsyncpa %s668, 1
    %670 = vsyncpa [#allocation5], 1
    %s671 = scalar_lea.sflag [#allocation5], 1
    %672 = vsyncpa %s671, 1

</llo_original>
